<compile_context>
chip_gen: v5e
topology: v5e:2x2
jax: 0.10.0
libtpu: 0.0.40
codegen_flags: <defaults>
</compile_context>

<pallas_src>
import functools

import jax
import jax.numpy as jnp
from jax.experimental import pallas as pl
from jax.experimental.pallas import tpu as pltpu


# ---------------------------------------------------------------------------
# Kernel
# ---------------------------------------------------------------------------
def _gf_kernel(prob_ref, x_ref, f_ref, out_ref, *, p_inf: bool, p_val, precision):
    """Grid = (batch, n_chunk); every step writes its own partial tile.

    prob_ref: (1, TN, K) VMEM, native dtype
    x_ref:    (1, K,  D) VMEM, native dtype (same block reused across n_chunks)
    f_ref:    (1, TN, D) VMEM, native dtype
    out_ref:  (1, 1, 8, D) f32 VMEM per-(bi, ni) partial; keeping 8 sublanes
              makes the in-kernel reduction pure full-vreg VPU work.
    """
    tn = prob_ref.shape[1]
    d = f_ref.shape[2]

    # One big (TN, K) x (K, D) matmul on the MXU, f32 accumulation.
    pred = jnp.dot(
        prob_ref[0], x_ref[0],
        preferred_element_type=jnp.float32,
        precision=precision,
    )                                                   # (TN, D) f32
    r = f_ref[0].astype(jnp.float32) - pred             # (TN, D) f32

    if p_inf:
        c = jnp.abs(r)
    elif p_val == 2.0:
        c = r * r
    elif float(p_val).is_integer() and 1.0 <= p_val <= 8.0:
        # Small integer p: repeated VPU multiplies (no EUP log/exp).
        a = jnp.abs(r)
        c = a
        for _ in range(int(p_val) - 1):
            c = c * a
    else:
        c = jnp.power(jnp.abs(r), jnp.float32(p_val))

    # Split the sublane axis only: (TN, D) -> (TN//8, 8, D).  Reducing over the
    # leading axis is a chain of unmasked full-vreg VPU adds/maxes.
    c = c.reshape(tn // 8, 8, d)
    if p_inf:
        part = jnp.max(c, axis=0)                        # (8, D)
    else:
        part = jnp.sum(c, axis=0)                        # (8, D)
    out_ref[...] = part[None, None]


# ---------------------------------------------------------------------------
# Tiling / budgeting helpers
# ---------------------------------------------------------------------------
def _round_up(v, m):
    return (v + m - 1) // m * m


def _sublane_multiple(dtype):
    # f32 -> 8, bf16 -> 16, int8/fp8 -> 32 rows per sublane tile.
    return max(8, 32 // jnp.dtype(dtype).itemsize)


def _vmem_capacity_bytes():
    try:
        info = pltpu.get_tpu_info()
        for attr in ("vmem_capacity_bytes", "vmem_size_bytes"):
            cap = getattr(info, attr, None)
            if cap:
                return int(cap)
    except Exception:
        pass
    return 64 * 1024 * 1024  # conservative (v7x per-TensorCore)


# ---------------------------------------------------------------------------
# Wrapper
# ---------------------------------------------------------------------------
def gf_loss(x, f, prob, n, p):
    """JAX/Pallas equivalent of GFLoss.forward(x, f, prob, n, p).

    prob: (B, N, K), x: (B, K, D), f: (B, N, D) -- torch.bmm layout.
    """
    B, N, K = prob.shape
    Bx, Kx, D = x.shape
    assert Bx == B and Kx == K and f.shape == (B, N, D)

    p_inf = (p == "Inf")
    p_val = None if p_inf else float(p)

    f32_inputs = (prob.dtype == jnp.float32 and x.dtype == jnp.float32)
    precision = jax.lax.Precision.HIGHEST if f32_inputs else None

    # --- layout-aware VMEM budgeting ------------------------------------
    isz_p, isz_x, isz_f = (prob.dtype.itemsize, x.dtype.itemsize,
                           f.dtype.itemsize)
    K_lane = _round_up(K, 128)                        # lane padding of prob
    D_lane = _round_up(D, 128)                        # lane padding of x/f/out
    K_sub = _round_up(K, _sublane_multiple(x.dtype))  # sublane padding of x
    sm = max(_sublane_multiple(prob.dtype), _sublane_multiple(f.dtype))

    vmem_cap = _vmem_capacity_bytes()
    if vmem_cap >= 100 * 2**20:          # v5e / v6e: 128 MiB physical VMEM
        vmem_limit = 100 * 2**20
    else:                                # v7x: 64 MiB physical per TensorCore
        vmem_limit = 48 * 2**20
    budget = vmem_limit - 8 * 2**20      # headroom for Mosaic internal scratch

    x_bytes = 2 * K_sub * D_lane * isz_x          # double-buffered x block
    out_bytes = 2 * 8 * D_lane * 4                # double-buffered out block
    # Per-row cost: double-buffered prob+f rows plus ~3 f32 intermediates
    # (pred / residual / power), all lane-padded.
    per_row = 2 * (K_lane * isz_p + D_lane * isz_f) + 3 * 4 * D_lane
    tn_cap = (budget - x_bytes - out_bytes) // per_row
    # TODO(synk): if the x block alone (K*D) blows the budget, a D-tiling grid
    # axis would be needed; not required for the shapes this loss sees.
    tn_cap = int(max(sm, min(tn_cap, 2048)))
    tn_cap = (tn_cap // sm) * sm

    # Pick TN so padding waste is minimal, then zero-pad N to a TN multiple.
    n_steps = -(-N // tn_cap)                     # ceil
    TN = _round_up(-(-N // n_steps), sm)
    N_pad = TN * n_steps
    if N_pad != N:
        pad = N_pad - N
        # Zero rows give residual 0 -> contribute 0 to both sum(|r|^p) and
        # max(|r|): semantics preserved.
        prob = jnp.pad(prob, ((0, 0), (0, pad), (0, 0)))
        f = jnp.pad(f, ((0, 0), (0, pad), (0, 0)))
    NN = n_steps

    kernel = functools.partial(_gf_kernel, p_inf=p_inf, p_val=p_val,
                               precision=precision)

    general_power = (not p_inf and p_val != 2.0
                     and not (float(p_val).is_integer() and 1.0 <= p_val <= 8.0))
    cost = pl.CostEstimate(
        flops=2 * B * N_pad * K * D,
        transcendentals=(2 * B * N_pad * D) if general_power else 0,
        bytes_accessed=(B * N_pad * K * isz_p
                        + B * K * D * isz_x
                        + B * N_pad * D * isz_f
                        + B * NN * 8 * D * 4),
    )

    partials = pl.pallas_call(
        kernel,
        out_shape=jax.ShapeDtypeStruct((B, NN, 8, D), jnp.float32),
        grid=(B, NN),
        in_specs=[
            pl.BlockSpec((1, TN, K), lambda bi, ni: (bi, ni, 0)),
            pl.BlockSpec((1, K, D), lambda bi, ni: (bi, 0, 0)),
            pl.BlockSpec((1, TN, D), lambda bi, ni: (bi, ni, 0)),
        ],
        out_specs=pl.BlockSpec((1, 1, 8, D), lambda bi, ni: (bi, ni, 0, 0)),
        compiler_params=pltpu.CompilerParams(
            # Independent output tiles per step -> both axes can be split
            # across TensorCores (v7x megacore) with no races.
            dimension_semantics=("parallel", "parallel"),
            vmem_limit_bytes=vmem_limit,
        ),
        cost_estimate=cost,
    )(prob, x, f)

    # Cheap scalar post-processing in plain JAX.
    if p_inf:
        m = jnp.max(partials)                     # max over chunks/sublanes/lanes
        return 0.5 * m * m                        # n forced to 1
    s = jnp.sum(partials, dtype=jnp.float32)      # sum(|r|^p)
    norm_sq = s if p_val == 2.0 else s ** (2.0 / p_val)
    return norm_sq / (2.0 * float(n) ** 2)


# ---------------------------------------------------------------------------
# Pure-JAX reference (sanity check)
# ---------------------------------------------------------------------------
def _gf_loss_ref(x, f, prob, n, p):
    r = f - jnp.einsum("bnk,bkd->bnd", prob, x,
                       precision=jax.lax.Precision.HIGHEST)
    if p == "Inf":
        return 0.5 * jnp.max(jnp.abs(r)) ** 2
    pv = float(p)
    if pv == 2.0:
        norm = jnp.sqrt(jnp.sum(r * r))
    else:
        norm = jnp.sum(jnp.abs(r) ** pv) ** (1.0 / pv)
    return 1.0 / (2.0 * float(n) ** 2) * norm ** 2


if __name__ == "__main__":
    key = jax.random.PRNGKey(0)
    k1, k2, k3 = jax.random.split(key, 3)

    # Small, forward-consistent shapes:  prob:(B,N,K)  x:(B,K,D)  f:(B,N,D)
    B, N, K, D = 2, 16, 8, 32
    x = jax.random.normal(k1, (B, K, D), dtype=jnp.float32)
    f = jax.random.normal(k2, (B, N, D), dtype=jnp.float32)
    prob = jax.nn.softmax(
        jax.random.normal(k3, (B, N, K), dtype=jnp.float32), axis=-1)
    n = 4

    # p = 2 (Frobenius), p = 'Inf' (n forced to 1), p = 3 (integer VPU path).
    for p in (2, "Inf", 3):
        out = gf_loss(x, f, prob, n, p)
        jax.block_until_ready(out)
        ref = _gf_loss_ref(x, f, prob, n, p)
        assert jnp.allclose(out, ref, rtol=1e-4, atol=1e-5), (p, out, ref)

    # Awkward N (not a multiple of 8) exercises the zero-padded tail path.
    N2 = 13
    f2 = jax.random.normal(k2, (B, N2, D), dtype=jnp.float32)
    prob2 = jax.nn.softmax(
        jax.random.normal(k3, (B, N2, K), dtype=jnp.float32), axis=-1)
    out2 = gf_loss(x, f2, prob2, n, 2)
    jax.block_until_ready(out2)
    ref2 = _gf_loss_ref(x, f2, prob2, n, 2)
    assert jnp.allclose(out2, ref2, rtol=1e-4, atol=1e-5), (out2, ref2)

    print("KERNEL_OK")
</pallas_src>

<mosaic_0001>
module attributes {stable_mosaic.version = 11 : i64} {
  func.func @_gf_kernel(%arg0: i32, %arg1: i32, %arg2: memref<1x16x8xf32, #tpu.memory_space<vmem>>, %arg3: memref<1x8x32xf32, #tpu.memory_space<vmem>>, %arg4: memref<1x16x32xf32, #tpu.memory_space<vmem>>, %arg5: memref<1x1x8x32xf32, #tpu.memory_space<vmem>>) attributes {dimension_semantics = [#tpu.dimension_semantics<parallel>, #tpu.dimension_semantics<parallel>], iteration_bounds = array<i64: 2, 1>, scalar_prefetch = 0 : i64, scratch_operands = 0 : i64, tpu.core_type = #tpu.core_type<tc>, window_params = [{transform_indices = @transform_0, window_bounds = array<i64: 1, 16, 8>}, {transform_indices = @transform_1, window_bounds = array<i64: 1, 8, 32>}, {transform_indices = @transform_2, window_bounds = array<i64: 1, 16, 32>}, {transform_indices = @transform_3, window_bounds = array<i64: 1, 1, 8, 32>}]} {
    %c0 = arith.constant 0 : index
    %c0_0 = arith.constant 0 : index
    %c0_1 = arith.constant 0 : index
    %0 = vector.load %arg2[%c0, %c0_0, %c0_1] : memref<1x16x8xf32, #tpu.memory_space<vmem>>, vector<1x16x8xf32>
    %1 = vector.shape_cast %0 : vector<1x16x8xf32> to vector<16x8xf32>
    %c0_2 = arith.constant 0 : index
    %c0_3 = arith.constant 0 : index
    %c0_4 = arith.constant 0 : index
    %2 = vector.load %arg3[%c0_2, %c0_3, %c0_4] : memref<1x8x32xf32, #tpu.memory_space<vmem>>, vector<1x8x32xf32>
    %3 = vector.shape_cast %2 : vector<1x8x32xf32> to vector<8x32xf32>
    %cst = arith.constant dense<0.000000e+00> : vector<16x32xf32>
    %4 = tpu.matmul %1, %3, %cst {dimension_numbers = #tpu.dot_dimension_numbers<[1], [0], [0], [1], [0, 0, 1, 1], [], []>, precision = #tpu.contract_precision<fp32>} : vector<16x8xf32>, vector<8x32xf32>, vector<16x32xf32> -> vector<16x32xf32>
    %c0_5 = arith.constant 0 : index
    %c0_6 = arith.constant 0 : index
    %c0_7 = arith.constant 0 : index
    %5 = vector.load %arg4[%c0_5, %c0_6, %c0_7] : memref<1x16x32xf32, #tpu.memory_space<vmem>>, vector<1x16x32xf32>
    %6 = vector.shape_cast %5 : vector<1x16x32xf32> to vector<16x32xf32>
    %7 = arith.subf %6, %4 : vector<16x32xf32>
    %8 = arith.mulf %7, %7 : vector<16x32xf32>
    %9 = vector.shape_cast %8 : vector<16x32xf32> to vector<2x8x32xf32>
    %cst_8 = arith.constant dense<0.000000e+00> : vector<8x32xf32>
    %10 = vector.multi_reduction <add>, %9, %cst_8 [0] : vector<2x8x32xf32> to vector<8x32xf32>
    %11 = vector.shape_cast %10 : vector<8x32xf32> to vector<1x1x8x32xf32>
    %c0_9 = arith.constant 0 : index
    %c0_10 = arith.constant 0 : index
    %c0_11 = arith.constant 0 : index
    %c0_12 = arith.constant 0 : index
    %12 = vector.load %arg5[%c0_9, %c0_10, %c0_11, %c0_12] : memref<1x1x8x32xf32, #tpu.memory_space<vmem>>, vector<1x1x8x32xf32>
    tpu.vector_store %arg5[%c0_9, %c0_10, %c0_11, %c0_12], %11 {strides = array<i32>} : memref<1x1x8x32xf32, #tpu.memory_space<vmem>>, vector<1x1x8x32xf32>,
    return
  }
  func.func @transform_0(%arg0: i32, %arg1: i32) -> (i32, i32, i32) {
    %c0_i32 = arith.constant 0 : i32
    %c0_i32_0 = arith.constant 0 : i32
    return %arg0, %arg1, %c0_i32 : i32, i32, i32
  }
  func.func @transform_1(%arg0: i32, %arg1: i32) -> (i32, i32, i32) {
    %c0_i32 = arith.constant 0 : i32
    %c0_i32_0 = arith.constant 0 : i32
    %c0_i32_1 = arith.constant 0 : i32
    return %arg0, %c0_i32, %c0_i32_0 : i32, i32, i32
  }
  func.func @transform_2(%arg0: i32, %arg1: i32) -> (i32, i32, i32) {
    %c0_i32 = arith.constant 0 : i32
    %c0_i32_0 = arith.constant 0 : i32
    return %arg0, %arg1, %c0_i32 : i32, i32, i32
  }
  func.func @transform_3(%arg0: i32, %arg1: i32) -> (i32, i32, i32, i32) {
    %c0_i32 = arith.constant 0 : i32
    %c0_i32_0 = arith.constant 0 : i32
    %c0_i32_1 = arith.constant 0 : i32
    return %arg0, %arg1, %c0_i32, %c0_i32_0 : i32, i32, i32, i32
  }
}

</mosaic_0001>

<llo_original>
// kernel: tpu_custom_call.1
$region0: #{tpu_custom_call.1}
  #allocation0 [shape = 'u32[]', space=smem, size = 0x4, offset = 0x4, fixed_abs, tag = 'smem constant byte address 0x4 - core index']
  #allocation1 [shape = 'u32[72,128]{1,0:T(1,128)}', space=vmem, size = 0x9000, scoped, tag = 'internal scratch']
  %s0 = inlined_call_operand.vmem [shape: f32[2,16,8], index: 0, kind: input, shape index: {}]
  %s1 = inlined_call_operand.vmem [shape: f32[2,8,32], index: 1, kind: input, shape index: {}]
  %s2 = inlined_call_operand.vmem [shape: f32[2,16,32], index: 2, kind: input, shape index: {}]
  %s3 = inlined_call_operand.hbm [shape: f32[2,1,8,32], index: 3, kind: output, shape index: {}]
  %s4 = sld [smem:[#allocation0]]
  $region45: #{tpu_custom_call.1} parent=0
    _
  %s6 = ssub.s32 1, %s4
  %s7 = scalar_select 0, %s6, %s4
  $region1: #{tpu_custom_call.1} parent=0
    #allocation2 [shape = 'u8[8192]{0}', space=vmem, size = 0x2000, scoped, tag = 'output window, operand 0']
    #allocation3 [shape = 's32[2]{0}', space=sflag, size = 0x8, scoped, tag = 'scoped memory for tpu_custom_call.1']
    %8 = vsyncpa [#allocation3], 0
    %s9 = scalar_lea.sflag [#allocation3], 1
    %10 = vsyncpa %s9, 0
    loop: start=0, step=1, limit=4
    $region2: #{tpu_custom_call.1} parent=1 // loop_pre_header
      _
    $region3: #{tpu_custom_call.1} parent=1 // loop_header
      %s12 = sphi 0, %s16
      %p13 = scmp.ge.s32.totalorder %s12, 4
      %s19 = sphi 0, %s31
      %s20 = sphi 0, %s27
      %s21 = sphi 0, %s19
      %s22 = sphi 0, %s20
      %s23 = sphi 0, %s21
      %s24 = sphi 0, %s22
      %s36 = sphi 0, %s38
      %s39 = sphi 0, %s36
      %s40 = sphi 0, %s39
      %s56 = sphi 0, %s40
      %s62 = sphi 0, %s64
      %s65 = sphi 0, %s62
      %s66 = sphi 0, %s65
      %s82 = sphi 0, %s66
      %s90 = sphi 0, %s92
      %s93 = sphi 0, %s90
      %s94 = sphi 0, %s93
      %s110 = sphi 0, %s94
      %s118 = sphi 0, %s120
      %s121 = sphi 0, %s118
      %s122 = sphi 0, %s121
      %s138 = sphi 0, %s122
    $region4: #{tpu_custom_call.1} parent=1 // loop_header_branch
      %15 = sbr.rel (%p13) target = $region8
    $region5: #{tpu_custom_call.1} parent=1 // loop_body
      %s17 = ssub.s32 %s12, 1
      %s18 = ssub.s32 %s12, 2
      %s25 = sadd.s32 1, %s20
      %p26 = scmp.ge.s32.totalorder %s25, 1
      %s27 = scalar_select %p26, 0, %s25
      %s28 = sadd.s32 1, %s19
      %s29 = scalar_select %p26, %s28, %s19
      %p30 = scmp.ge.s32.totalorder %s29, 2
      %s31 = scalar_select %p30, 0, %s29
      %s32 = ssub.s32 %s19, %s31
      %s33 = ssub.s32 %s20, %s27
      %s34 = sor.u32 %s32, %s33
      %p35 = scmp.eq.s32.totalorder %s34, 0
      %s37 = sadd.s32 %s36, 1
      %s38 = scalar_select %p35, %s36, %s37
      %p41 = pneg %p35
      %p42 = scmp.eq.s32.totalorder %s12, 1
      %p43 = por %p41, %p42
      %p44 = scmp.ne.s32.totalorder %s36, %s39
      %p45 = scmp.eq.s32.totalorder %s12, 0
      %p46 = por %p44, %p45
      %p47 = scmp.ne.s32.totalorder %s36, %s39
      %p48 = scmp.eq.s32.totalorder %s17, 1
      %p49 = por %p47, %p48
      %p50 = scmp.ne.s32.totalorder %s39, %s40
      %p51 = scmp.eq.s32.totalorder %s17, 0
      %p52 = por %p50, %p51
      %p53 = scmp.ne.s32.totalorder %s39, %s40
      %p54 = scmp.eq.s32.totalorder %s18, 1
      %p55 = por %p53, %p54
      %p57 = scmp.ne.s32.totalorder %s40, %s56
      %p58 = scmp.eq.s32.totalorder %s18, 0
      %p59 = por %p57, %p58
      %s60 = ssub.s32 %s19, %s31
      %p61 = scmp.eq.s32.totalorder %s60, 0
      %s63 = sadd.s32 %s62, 1
      %s64 = scalar_select %p61, %s62, %s63
      %p67 = pneg %p61
      %p68 = scmp.eq.s32.totalorder %s12, 1
      %p69 = por %p67, %p68
      %p70 = scmp.ne.s32.totalorder %s62, %s65
      %p71 = scmp.eq.s32.totalorder %s12, 0
      %p72 = por %p70, %p71
      %p73 = scmp.ne.s32.totalorder %s62, %s65
      %p74 = scmp.eq.s32.totalorder %s17, 1
      %p75 = por %p73, %p74
      %p76 = scmp.ne.s32.totalorder %s65, %s66
      %p77 = scmp.eq.s32.totalorder %s17, 0
      %p78 = por %p76, %p77
      %p79 = scmp.ne.s32.totalorder %s65, %s66
      %p80 = scmp.eq.s32.totalorder %s18, 1
      %p81 = por %p79, %p80
      %p83 = scmp.ne.s32.totalorder %s66, %s82
      %p84 = scmp.eq.s32.totalorder %s18, 0
      %p85 = por %p83, %p84
      %s86 = ssub.s32 %s19, %s31
      %s87 = ssub.s32 %s20, %s27
      %s88 = sor.u32 %s86, %s87
      %p89 = scmp.eq.s32.totalorder %s88, 0
      %s91 = sadd.s32 %s90, 1
      %s92 = scalar_select %p89, %s90, %s91
      %p95 = pneg %p89
      %p96 = scmp.eq.s32.totalorder %s12, 1
      %p97 = por %p95, %p96
      %p98 = scmp.ne.s32.totalorder %s90, %s93
      %p99 = scmp.eq.s32.totalorder %s12, 0
      %p100 = por %p98, %p99
      %p101 = scmp.ne.s32.totalorder %s90, %s93
      %p102 = scmp.eq.s32.totalorder %s17, 1
      %p103 = por %p101, %p102
      %p104 = scmp.ne.s32.totalorder %s93, %s94
      %p105 = scmp.eq.s32.totalorder %s17, 0
      %p106 = por %p104, %p105
      %p107 = scmp.ne.s32.totalorder %s93, %s94
      %p108 = scmp.eq.s32.totalorder %s18, 1
      %p109 = por %p107, %p108
      %p111 = scmp.ne.s32.totalorder %s94, %s110
      %p112 = scmp.eq.s32.totalorder %s18, 0
      %p113 = por %p111, %p112
      %s114 = ssub.s32 %s19, %s31
      %s115 = ssub.s32 %s20, %s27
      %s116 = sor.u32 %s114, %s115
      %p117 = scmp.eq.s32.totalorder %s116, 0
      %s119 = sadd.s32 %s118, 1
      %s120 = scalar_select %p117, %s118, %s119
      %p123 = pneg %p117
      %p124 = scmp.eq.s32.totalorder %s12, 1
      %p125 = por %p123, %p124
      %p126 = scmp.ne.s32.totalorder %s118, %s121
      %p127 = scmp.eq.s32.totalorder %s12, 0
      %p128 = por %p126, %p127
      %p129 = scmp.ne.s32.totalorder %s118, %s121
      %p130 = scmp.eq.s32.totalorder %s17, 1
      %p131 = por %p129, %p130
      %p132 = scmp.ne.s32.totalorder %s121, %s122
      %p133 = scmp.eq.s32.totalorder %s17, 0
      %p134 = por %p132, %p133
      %p135 = scmp.ne.s32.totalorder %s121, %s122
      %p136 = scmp.eq.s32.totalorder %s18, 1
      %p137 = por %p135, %p136
      %p139 = scmp.ne.s32.totalorder %s122, %s138
      %p140 = scmp.eq.s32.totalorder %s18, 0
      %p141 = por %p139, %p140
      %p142 = scmp.le.s32.totalorder 1, %s12
      %p143 = scmp.lt.s32.totalorder %s12, 3
      %p144 = pnand %p142, %p143
      %p145 = pneg %p144
      // Predicated region
      $region9: #{tpu_custom_call.1} parent=5 // pred_check
        _
      $region10: #{tpu_custom_call.1} parent=5 // pred_check_branch
        %147 = sbr.rel (%p144) target = $region12
      $region11: #{tpu_custom_call.1} parent=5 // pred_region
        %s148 = ssub.s32 %s12, 1
      $region12: #{tpu_custom_call.1} parent=5 // pred_fallthru
        _
      %p149 = scmp.lt.s32.totalorder %s12, 2
      // Predicated region
      $region13: #{tpu_custom_call.1} parent=5 // pred_check
        %p150 = pneg %p149
      $region14: #{tpu_custom_call.1} parent=5 // pred_check_branch
        %152 = sbr.rel (%p150) target = $region16
      $region15: #{tpu_custom_call.1} parent=5 // pred_region
        // Predicated region
        $region17: #{tpu_custom_call.1} parent=15 // pred_check
          %p153 = pneg %p46
        $region18: #{tpu_custom_call.1} parent=15 // pred_check_branch
          %155 = sbr.rel (%p153) target = $region20
        $region19: #{tpu_custom_call.1} parent=15 // pred_region
          %s156 = smul.u32 2, %s20
          %p157 = scmp.lt.s32.totalorder %s19, 1
          %s158 = scalar_select %p157, %s19, 1
          %p159 = scmp.lt.s32.totalorder %s156, 1
          %s160 = scalar_select %p159, %s156, 1
          %s161 = smul.addr %s158, 2
          %s162 = sadd.s32 %s160, %s161
          %s163 = smul.addr %s162, 8
          %s164 = scalar_lea.vmem %s0, %s163
          %s165 = smul.u32 2, %s20
        $region20: #{tpu_custom_call.1} parent=15 // pred_fallthru
          _
        // Predicated region
        $region21: #{tpu_custom_call.1} parent=15 // pred_check
          %p166 = pneg %p72
        $region22: #{tpu_custom_call.1} parent=15 // pred_check_branch
          %168 = sbr.rel (%p166) target = $region24
        $region23: #{tpu_custom_call.1} parent=15 // pred_region
          %p169 = scmp.lt.s32.totalorder %s19, 1
          %s170 = scalar_select %p169, %s19, 1
          %s171 = smul.addr %s170, 8
          %s172 = scalar_lea.vmem %s1, %s171
        $region24: #{tpu_custom_call.1} parent=15 // pred_fallthru
          _
        // Predicated region
        $region25: #{tpu_custom_call.1} parent=15 // pred_check
          %p173 = pneg %p100
        $region26: #{tpu_custom_call.1} parent=15 // pred_check_branch
          %175 = sbr.rel (%p173) target = $region28
        $region27: #{tpu_custom_call.1} parent=15 // pred_region
          %s176 = smul.u32 2, %s20
          %p177 = scmp.lt.s32.totalorder %s19, 1
          %s178 = scalar_select %p177, %s19, 1
          %p179 = scmp.lt.s32.totalorder %s176, 1
          %s180 = scalar_select %p179, %s176, 1
          %s181 = smul.addr %s178, 2
          %s182 = sadd.s32 %s180, %s181
          %s183 = smul.addr %s182, 8
          %s184 = scalar_lea.vmem %s2, %s183
          %s185 = smul.u32 2, %s20
        $region28: #{tpu_custom_call.1} parent=15 // pred_fallthru
          _
      $region16: #{tpu_custom_call.1} parent=5 // pred_fallthru
        _
      %p186 = scmp.le.s32.totalorder 1, %s12
      %p187 = scmp.lt.s32.totalorder %s12, 3
      %p188 = pnand %p186, %p187
      %p189 = pneg %p188
      // Predicated region
      $region29: #{tpu_custom_call.1} parent=5 // pred_check
        _
      $region30: #{tpu_custom_call.1} parent=5 // pred_check_branch
        %191 = sbr.rel (%p188) target = $region32
      $region31: #{tpu_custom_call.1} parent=5 // pred_region
        %s192 = ssub.s32 %s12, 1
        %s193 = smul.u32 2, %s22
        %p194 = scmp.lt.s32.totalorder %s21, 1
        %s195 = scalar_select %p194, %s21, 1
        %p196 = scmp.lt.s32.totalorder %s193, 1
        %s197 = scalar_select %p196, %s193, 1
        %s198 = smul.addr %s195, 2
        %s199 = sadd.s32 %s197, %s198
        %s200 = smul.addr %s199, 8
        %s201 = scalar_lea.vmem %s0, %s200
        %p202 = pneg %p52
        %p203 = pneg %p49
        %p204 = scmp.lt.s32.totalorder %s21, 1
        %s205 = scalar_select %p204, %s21, 1
        %s206 = smul.addr %s205, 8
        %s207 = scalar_lea.vmem %s1, %s206
        %p208 = pneg %p78
        %p209 = pneg %p75
        %s210 = smul.u32 2, %s22
        %p211 = scmp.lt.s32.totalorder %s21, 1
        %s212 = scalar_select %p211, %s21, 1
        %p213 = scmp.lt.s32.totalorder %s210, 1
        %s214 = scalar_select %p213, %s210, 1
        %s215 = smul.addr %s212, 2
        %s216 = sadd.s32 %s214, %s215
        %s217 = smul.addr %s216, 8
        %s218 = scalar_lea.vmem %s2, %s217
        %p219 = pneg %p106
        %p220 = pneg %p103
        %p221 = pneg %p134
        %p222 = pneg %p131
        %s223 = sand.u32 %s121, 1
        %s224 = scalar_lea.sflag [#allocation3], %s223
        %s225 = sand.u32 %s121, 1
        %s226 = smul.addr %s225, 8
        %s227 = scalar_lea.vmem [#allocation2], %s226
        %s228 = smul.u32 2, %s22
        %p229 = scmp.lt.s32.totalorder %s21, 1
        %s230 = scalar_select %p229, %s21, 1
        %p231 = scmp.lt.s32.totalorder %s228, 1
        %s232 = scalar_select %p231, %s228, 1
        %s233 = smul.addr %s230, 2
        %s234 = sadd.s32 %s232, %s233
        %s235 = smul.addr %s234, 8
        %s236 = scalar_lea.vmem %s0, %s235
        %s237 = smul.u32 2, %s22
        %p238 = scmp.lt.s32.totalorder %s21, 1
        %s239 = scalar_select %p238, %s21, 1
        %s240 = smul.addr %s239, 8
        %s241 = scalar_lea.vmem %s1, %s240
        %s242 = smul.u32 2, %s22
        %p243 = scmp.lt.s32.totalorder %s21, 1
        %s244 = scalar_select %p243, %s21, 1
        %p245 = scmp.lt.s32.totalorder %s242, 1
        %s246 = scalar_select %p245, %s242, 1
        %s247 = smul.addr %s244, 2
        %s248 = sadd.s32 %s246, %s247
        %s249 = smul.addr %s248, 8
        %s250 = scalar_lea.vmem %s2, %s249
        %s251 = smul.u32 2, %s22
        %v252 = vld [vmem:[%s236] sm:$0xff]
        %v253 = vld [vmem:[%s236 + $0x8] sm:$0xff]
        %v254 = vld [vmem:[%s241] sm:$0xff]
        %vm255 = vcmask 64512
        %v257 = vsel %vm255, %v252, 0
        %v260 = vsel %vm255, %v253, 0
        %262 = vmatpush.msra.mxu0 0.0
        %263 = vmatpush.msra.mxu0 0.0
        %264 = vmatpush.msra.mxu0 0.0
        %265 = vmatpush.msra.mxu0 0.0
        %266 = vmatpush.msra.mxu0 0.0
        %267 = vmatpush.msra.mxu0 0.0
        %268 = vmatpush.msra.mxu0 0.0
        %269 = vmatpush.msra.mxu0 0.0
        %270 = vmatpush.msra.mxu0 0.0
        %271 = vmatpush.msra.mxu0 0.0
        %272 = vmatpush.msra.mxu0 0.0
        %273 = vmatpush.msra.mxu0 0.0
        %274 = vmatpush.msra.mxu0 0.0
        %275 = vmatpush.msra.mxu0 0.0
        %276 = vmatpush.msra.mxu0 0.0
        %v277 = vand.u32 %v254, 4294901760
        %278 = vmatpush.msra.mxu0 %v277
        %v279 = vand.u32 %v257, 4294901760
        %v280 = vsub.f32 %v257, %v279
        %v281 = vand.u32 %v280, 4294901760
        %v282 = vsub.f32 %v280, %v281
        %v283 = vand.u32 %v282, 4294901760
        %284 = vmatmul.f32.gmra.mxu0 %v283
        %v285 = vpop.f32.mrf.mxu0
        %v286 = vadd.f32 0.0, %v285
        %v287 = vand.u32 %v260, 4294901760
        %v288 = vsub.f32 %v260, %v287
        %v289 = vand.u32 %v288, 4294901760
        %v290 = vsub.f32 %v288, %v289
        %v291 = vand.u32 %v290, 4294901760
        %292 = vmatmul.f32.gmra.mxu0 %v291
        %v293 = vpop.f32.mrf.mxu0
        %v294 = vadd.f32 0.0, %v293
        %295 = vdwg.mxu0
        %296 = vmatpush.msra.mxu0 0.0
        %297 = vmatpush.msra.mxu0 0.0
        %298 = vmatpush.msra.mxu0 0.0
        %299 = vmatpush.msra.mxu0 0.0
        %300 = vmatpush.msra.mxu0 0.0
        %301 = vmatpush.msra.mxu0 0.0
        %302 = vmatpush.msra.mxu0 0.0
        %303 = vmatpush.msra.mxu0 0.0
        %304 = vmatpush.msra.mxu0 0.0
        %305 = vmatpush.msra.mxu0 0.0
        %306 = vmatpush.msra.mxu0 0.0
        %307 = vmatpush.msra.mxu0 0.0
        %308 = vmatpush.msra.mxu0 0.0
        %309 = vmatpush.msra.mxu0 0.0
        %310 = vmatpush.msra.mxu0 0.0
        %v311 = vand.u32 %v254, 4294901760
        %v312 = vsub.f32 %v254, %v311
        %v313 = vand.u32 %v312, 4294901760
        %v314 = vsub.f32 %v312, %v313
        %v315 = vand.u32 %v314, 4294901760
        %316 = vmatpush.msra.mxu0 %v315
        %v317 = vand.u32 %v257, 4294901760
        %318 = vmatmul.f32.gmra.mxu0 %v317
        %v319 = vpop.f32.mrf.mxu0
        %v320 = vadd.f32 %v286, %v319
        %v321 = vand.u32 %v260, 4294901760
        %322 = vmatmul.f32.gmra.mxu0 %v321
        %v323 = vpop.f32.mrf.mxu0
        %v324 = vadd.f32 %v294, %v323
        %325 = vdwg.mxu0
        %326 = vmatpush.msra.mxu0 0.0
        %327 = vmatpush.msra.mxu0 0.0
        %328 = vmatpush.msra.mxu0 0.0
        %329 = vmatpush.msra.mxu0 0.0
        %330 = vmatpush.msra.mxu0 0.0
        %331 = vmatpush.msra.mxu0 0.0
        %332 = vmatpush.msra.mxu0 0.0
        %333 = vmatpush.msra.mxu0 0.0
        %334 = vmatpush.msra.mxu0 0.0
        %335 = vmatpush.msra.mxu0 0.0
        %336 = vmatpush.msra.mxu0 0.0
        %337 = vmatpush.msra.mxu0 0.0
        %338 = vmatpush.msra.mxu0 0.0
        %339 = vmatpush.msra.mxu0 0.0
        %340 = vmatpush.msra.mxu0 0.0
        %v341 = vand.u32 %v254, 4294901760
        %v342 = vsub.f32 %v254, %v341
        %343 = vmatpush.msra.mxu0 %v342
        %v344 = vand.u32 %v257, 4294901760
        %v345 = vsub.f32 %v257, %v344
        %346 = vmatmul.f32.gmra.mxu0 %v345
        %v347 = vpop.f32.mrf.mxu0
        %v348 = vadd.f32 %v320, %v347
        %v349 = vand.u32 %v260, 4294901760
        %v350 = vsub.f32 %v260, %v349
        %351 = vmatmul.f32.gmra.mxu0 %v350
        %v352 = vpop.f32.mrf.mxu0
        %v353 = vadd.f32 %v324, %v352
        %354 = vdwg.mxu0
        %355 = vmatpush.msra.mxu0 0.0
        %356 = vmatpush.msra.mxu0 0.0
        %357 = vmatpush.msra.mxu0 0.0
        %358 = vmatpush.msra.mxu0 0.0
        %359 = vmatpush.msra.mxu0 0.0
        %360 = vmatpush.msra.mxu0 0.0
        %361 = vmatpush.msra.mxu0 0.0
        %362 = vmatpush.msra.mxu0 0.0
        %363 = vmatpush.msra.mxu0 0.0
        %364 = vmatpush.msra.mxu0 0.0
        %365 = vmatpush.msra.mxu0 0.0
        %366 = vmatpush.msra.mxu0 0.0
        %367 = vmatpush.msra.mxu0 0.0
        %368 = vmatpush.msra.mxu0 0.0
        %369 = vmatpush.msra.mxu0 0.0
        %v370 = vand.u32 %v254, 4294901760
        %371 = vmatpush.msra.mxu0 %v370
        %v372 = vand.u32 %v257, 4294901760
        %v373 = vsub.f32 %v257, %v372
        %v374 = vand.u32 %v373, 4294901760
        %375 = vmatmul.f32.gmra.mxu0 %v374
        %v376 = vpop.f32.mrf.mxu0
        %v377 = vadd.f32 %v348, %v376
        %v378 = vand.u32 %v260, 4294901760
        %v379 = vsub.f32 %v260, %v378
        %v380 = vand.u32 %v379, 4294901760
        %381 = vmatmul.f32.gmra.mxu0 %v380
        %v382 = vpop.f32.mrf.mxu0
        %v383 = vadd.f32 %v353, %v382
        %384 = vdwg.mxu0
        %385 = vmatpush.msra.mxu0 0.0
        %386 = vmatpush.msra.mxu0 0.0
        %387 = vmatpush.msra.mxu0 0.0
        %388 = vmatpush.msra.mxu0 0.0
        %389 = vmatpush.msra.mxu0 0.0
        %390 = vmatpush.msra.mxu0 0.0
        %391 = vmatpush.msra.mxu0 0.0
        %392 = vmatpush.msra.mxu0 0.0
        %393 = vmatpush.msra.mxu0 0.0
        %394 = vmatpush.msra.mxu0 0.0
        %395 = vmatpush.msra.mxu0 0.0
        %396 = vmatpush.msra.mxu0 0.0
        %397 = vmatpush.msra.mxu0 0.0
        %398 = vmatpush.msra.mxu0 0.0
        %399 = vmatpush.msra.mxu0 0.0
        %v400 = vand.u32 %v254, 4294901760
        %v401 = vsub.f32 %v254, %v400
        %v402 = vand.u32 %v401, 4294901760
        %403 = vmatpush.msra.mxu0 %v402
        %v404 = vand.u32 %v257, 4294901760
        %405 = vmatmul.f32.gmra.mxu0 %v404
        %v406 = vpop.f32.mrf.mxu0
        %v407 = vadd.f32 %v377, %v406
        %v408 = vand.u32 %v260, 4294901760
        %409 = vmatmul.f32.gmra.mxu0 %v408
        %v410 = vpop.f32.mrf.mxu0
        %v411 = vadd.f32 %v383, %v410
        %412 = vdwg.mxu0
        %413 = vmatpush.msra.mxu0 0.0
        %414 = vmatpush.msra.mxu0 0.0
        %415 = vmatpush.msra.mxu0 0.0
        %416 = vmatpush.msra.mxu0 0.0
        %417 = vmatpush.msra.mxu0 0.0
        %418 = vmatpush.msra.mxu0 0.0
        %419 = vmatpush.msra.mxu0 0.0
        %420 = vmatpush.msra.mxu0 0.0
        %421 = vmatpush.msra.mxu0 0.0
        %422 = vmatpush.msra.mxu0 0.0
        %423 = vmatpush.msra.mxu0 0.0
        %424 = vmatpush.msra.mxu0 0.0
        %425 = vmatpush.msra.mxu0 0.0
        %426 = vmatpush.msra.mxu0 0.0
        %427 = vmatpush.msra.mxu0 0.0
        %v428 = vand.u32 %v254, 4294901760
        %429 = vmatpush.msra.mxu0 %v428
        %v430 = vand.u32 %v257, 4294901760
        %431 = vmatmul.f32.gmra.mxu0 %v430
        %v432 = vpop.f32.mrf.mxu0
        %v433 = vadd.f32 %v407, %v432
        %v434 = vand.u32 %v260, 4294901760
        %435 = vmatmul.f32.gmra.mxu0 %v434
        %v436 = vpop.f32.mrf.mxu0
        %v437 = vadd.f32 %v411, %v436
        %438 = vdwg.mxu0
        %v439 = vld [vmem:[%s250] sm:$0xff]
        %v440 = vld [vmem:[%s250 + $0x8] sm:$0xff]
        %v441 = vsub.f32 %v439, %v433
        %v442 = vsub.f32 %v440, %v437
        %v443 = vmul.f32 %v441, %v441
        %v444 = vmul.f32 %v442, %v442
        %vm445 = vcmask 261120
        %v446 = vsel %vm445, %v443, 0.0
        %v447 = vsel %vm445, %v444, 0.0
        %v448 = vadd.f32 %v446, %v447
        %449 = vst.msk [vmem:[%s227] sm:$0xff] %vm445, %v448
        %s450 = sand.u32 %s121, 1
        %s451 = scalar_lea.sflag [#allocation3], %s450
        %s452 = sand.u32 %s121, 1
        %s453 = smul.addr %s452, 8
        %s454 = scalar_lea.vmem [#allocation2], %s453
        // Predicated region
        $region33: #{tpu_custom_call.1} parent=31 // pred_check
          %p455 = pneg %p131
        $region34: #{tpu_custom_call.1} parent=31 // pred_check_branch
          %457 = sbr.rel (%p455) target = $region36
        $region35: #{tpu_custom_call.1} parent=31 // pred_region
          %459 = vsyncadd %s451, 0
          %s460 = sadd.s32 %s22, %s21
          %s461 = smul.addr %s460, 8
          %s462 = scalar_lea.hbm %s3, %s461
          %s464 = sshll.u32 %s454, 4
          %s465 = int_to_ptr.vmem [resolvable:$true] %s464
          %s466 = sshll.u32 %s462, 4
          %s467 = int_to_ptr.hbm [resolvable:$true] %s466
          %469 = dma.vmem_to_hbm [thread:$0]  %s465, 128, %s467, %s451
        $region36: #{tpu_custom_call.1} parent=31 // pred_fallthru
          _
      $region32: #{tpu_custom_call.1} parent=5 // pred_fallthru
        _
      %p470 = scmp.le.s32.totalorder 2, %s12
      // Predicated region
      $region37: #{tpu_custom_call.1} parent=5 // pred_check
        %p471 = pneg %p470
      $region38: #{tpu_custom_call.1} parent=5 // pred_check_branch
        %473 = sbr.rel (%p471) target = $region40
      $region39: #{tpu_custom_call.1} parent=5 // pred_region
        %s474 = ssub.s32 %s12, 2
        // Predicated region
        $region41: #{tpu_custom_call.1} parent=39 // pred_check
          %p475 = pneg %p137
        $region42: #{tpu_custom_call.1} parent=39 // pred_check_branch
          %477 = sbr.rel (%p475) target = $region44
        $region43: #{tpu_custom_call.1} parent=39 // pred_region
          %s478 = sand.u32 %s122, 1
          %s479 = scalar_lea.sflag [#allocation3], %s478
          %s480 = sand.u32 %s122, 1
          %s481 = smul.addr %s480, 8
          %s482 = scalar_lea.vmem [#allocation2], %s481
          %484 = dma.done %s479, 128
        $region44: #{tpu_custom_call.1} parent=39 // pred_fallthru
          _
      $region40: #{tpu_custom_call.1} parent=5 // pred_fallthru
        _
    $region6: #{tpu_custom_call.1} parent=1 // loop_footer
      %s16 = sadd.s32 1, %s12
    $region7: #{tpu_custom_call.1} parent=1 // loop_footer_branch
      %11 = sbr.rel target = $region3
    $region8: #{tpu_custom_call.1} parent=1 // loop_exit
      _
    %485 = vsyncpa [#allocation3], 1
    %s486 = scalar_lea.sflag [#allocation3], 1
    %487 = vsyncpa %s486, 1

</llo_original>
